<compile_context>
chip_gen: v6e
topology: v6e:2x2x1
jax: 0.10.0
libtpu: 0.0.40
codegen_flags: <defaults>
</compile_context>

<pallas_src>
import jax
import jax.numpy as jnp
from jax.experimental import pallas as pl
from jax.experimental.pallas import tpu as pltpu


# ----------------------------------------------------------------------------
# Generic matmul: single-VMEM-block fast path + tiled accumulating fallback
# ----------------------------------------------------------------------------
def _matmul_kernel(a_ref, b_ref, o_ref):
    o_ref[...] = jnp.dot(a_ref[...], b_ref[...],
                         preferred_element_type=jnp.float32)


def _matmul_ta_kernel(a_ref, b_ref, o_ref):
    # a is passed untransposed; the transpose stays in VMEM (no HBM a.T copy).
    o_ref[...] = jnp.dot(a_ref[...].T, b_ref[...],
                         preferred_element_type=jnp.float32)


def _tiled_matmul_kernel(a_ref, b_ref, o_ref, acc_ref):
    @pl.when(pl.program_id(2) == 0)
    def _():
        acc_ref[...] = jnp.zeros_like(acc_ref)

    acc_ref[...] += jnp.dot(a_ref[...], b_ref[...],
                            preferred_element_type=jnp.float32)

    @pl.when(pl.program_id(2) == pl.num_programs(2) - 1)
    def _():
        o_ref[...] = acc_ref[...]


_TILE_M, _TILE_N, _TILE_K = 256, 256, 256       # ~1.8 MiB live: safe for v7x 64 MiB VMEM
_SINGLE_BLOCK_BYTES = 4 * 1024 * 1024           # single-VMEM-block fast-path budget


def _round_up(x, m):
    return (x + m - 1) // m * m


def _tiled_matmul(a, b):
    M, K = a.shape
    _, N = b.shape
    tm, tn, tk = _TILE_M, _TILE_N, _TILE_K
    Mp, Kp, Np = _round_up(M, tm), _round_up(K, tk), _round_up(N, tn)
    a_p = jnp.pad(a, ((0, Mp - M), (0, Kp - K)))
    b_p = jnp.pad(b, ((0, Kp - K), (0, Np - N)))
    out = pl.pallas_call(
        _tiled_matmul_kernel,
        out_shape=jax.ShapeDtypeStruct((Mp, Np), jnp.float32),
        grid=(Mp // tm, Np // tn, Kp // tk),
        in_specs=[pl.BlockSpec((tm, tk), lambda i, j, k: (i, k)),
                  pl.BlockSpec((tk, tn), lambda i, j, k: (k, j))],
        out_specs=pl.BlockSpec((tm, tn), lambda i, j, k: (i, j)),
        scratch_shapes=[pltpu.VMEM((tm, tn), jnp.float32)],
        compiler_params=pltpu.CompilerParams(
            dimension_semantics=("parallel", "parallel", "arbitrary"),
            vmem_limit_bytes=32 * 1024 * 1024),
        cost_estimate=pl.CostEstimate(
            flops=2 * Mp * Np * Kp, transcendentals=0,
            bytes_accessed=4 * (Mp * Kp + Kp * Np + Mp * Np)),
    )(a_p, b_p)
    return out[:M, :N]


def pallas_matmul(a, b, trans_a=False):
    """a @ b (or a.T @ b) on the MXU."""
    a = jnp.asarray(a, jnp.float32)
    b = jnp.asarray(b, jnp.float32)
    if trans_a:
        K, M = a.shape
    else:
        M, K = a.shape
    K2, N = b.shape
    assert K == K2, (a.shape, b.shape, trans_a)
    total_bytes = 4 * (a.size + b.size + M * N)
    if total_bytes <= _SINGLE_BLOCK_BYTES:
        kern = _matmul_ta_kernel if trans_a else _matmul_kernel
        return pl.pallas_call(
            kern,
            out_shape=jax.ShapeDtypeStruct((M, N), jnp.float32),
            grid=(1,),
            in_specs=[pl.BlockSpec(a.shape, lambda i: (0, 0)),
                      pl.BlockSpec(b.shape, lambda i: (0, 0))],
            out_specs=pl.BlockSpec((M, N), lambda i: (0, 0)),
        )(a, b)
    if trans_a:
        a = a.T
    return _tiled_matmul(a, b)


# ----------------------------------------------------------------------------
# Fused kernels for the CTMRG / observable contraction chains
# ----------------------------------------------------------------------------
def _rho12_kernel(c_ref, e_ref, et_ref, o_ref):
    # r1(e,(g,a)) = C(e,f) E(f,(g,a)) ;  out((h,c),(g,a)) = E(e,(h,c)) r1(e,(g,a))
    r1 = jnp.dot(c_ref[...], e_ref[...], preferred_element_type=jnp.float32)
    o_ref[...] = jnp.dot(et_ref[...], r1, preferred_element_type=jnp.float32)


def pallas_rho12(C, E_flat):
    """Two Rho-build GEMMs in one kernel; the intermediate never leaves VMEM."""
    dimE, n = E_flat.shape
    return pl.pallas_call(
        _rho12_kernel,
        out_shape=jax.ShapeDtypeStruct((n, n), jnp.float32),
        grid=(1,),
        in_specs=[pl.BlockSpec((dimE, dimE), lambda i: (0, 0)),
                  pl.BlockSpec((dimE, n), lambda i: (0, 0)),
                  pl.BlockSpec((n, dimE), lambda i: (0, 0))],
        out_specs=pl.BlockSpec((n, n), lambda i: (0, 0)),
    )(jnp.asarray(C, jnp.float32), E_flat, E_flat.T)


def _sym_normalize_kernel(m_ref, o_ref):
    m = m_ref[...]
    s = m + m.T
    ss = jnp.sum(s * s)                     # full reduce, stays in VMEM
    o_ref[...] = s / jnp.sqrt(ss)


def pallas_sym_normalize(m):
    """(M + M^T) / ||M + M^T||_F in a single pass."""
    m = jnp.asarray(m, jnp.float32)
    n = m.shape[0]
    return pl.pallas_call(
        _sym_normalize_kernel,
        out_shape=jax.ShapeDtypeStruct((n, n), jnp.float32),
        grid=(1,),
        in_specs=[pl.BlockSpec((n, n), lambda i: (0, 0))],
        out_specs=pl.BlockSpec((n, n), lambda i: (0, 0)),
    )(m)


def _project_sym_kernel(rho_ref, p_ref, o_ref):
    t = jnp.dot(rho_ref[...], p_ref[...], preferred_element_type=jnp.float32)
    c = jnp.dot(p_ref[...].T, t, preferred_element_type=jnp.float32)
    o_ref[...] = 0.5 * (c + c.T)


def pallas_project_sym(Rho, P):
    """C_new = sym(P^T Rho P): two GEMMs + symmetrization in one kernel."""
    Rho = jnp.asarray(Rho, jnp.float32)
    P = jnp.asarray(P, jnp.float32)
    n, k = P.shape
    return pl.pallas_call(
        _project_sym_kernel,
        out_shape=jax.ShapeDtypeStruct((k, k), jnp.float32),
        grid=(1,),
        in_specs=[pl.BlockSpec((n, n), lambda i: (0, 0)),
                  pl.BlockSpec((n, k), lambda i: (0, 0))],
        out_specs=pl.BlockSpec((k, k), lambda i: (0, 0)),
    )(Rho, P)


def _self_gram_kernel(a_ref, o_ref):
    a = a_ref[...]
    o_ref[...] = jnp.dot(a, a.T, preferred_element_type=jnp.float32)


def pallas_self_gram(a):
    """A @ A^T without materializing A^T in HBM."""
    a = jnp.asarray(a, jnp.float32)
    m = a.shape[0]
    return pl.pallas_call(
        _self_gram_kernel,
        out_shape=jax.ShapeDtypeStruct((m, m), jnp.float32),
        grid=(1,),
        in_specs=[pl.BlockSpec(a.shape, lambda i: (0, 0))],
        out_specs=pl.BlockSpec((m, m), lambda i: (0, 0)),
    )(a)


def _double_layer_kernel(a_ref, at_ref, o_ref):
    # T2[i, j] = sum_m a[m, i] * a[m, j]  — depth-d contraction done as VPU
    # rank-1 updates instead of a K=d MXU pass (MXU would be >98% idle).
    a = a_ref[...]        # (d, n)
    at = at_ref[...]      # (n, d)
    d = a.shape[0]
    acc = at[:, 0:1] * a[0:1, :]
    for m in range(1, d):                       # d is tiny & static
        acc = acc + at[:, m:m + 1] * a[m:m + 1, :]
    o_ref[...] = acc


def pallas_double_layer(af):
    af = jnp.asarray(af, jnp.float32)
    d, n = af.shape
    return pl.pallas_call(
        _double_layer_kernel,
        out_shape=jax.ShapeDtypeStruct((n, n), jnp.float32),
        grid=(1,),
        in_specs=[pl.BlockSpec((d, n), lambda i: (0, 0)),
                  pl.BlockSpec((n, d), lambda i: (0, 0))],
        out_specs=pl.BlockSpec((n, n), lambda i: (0, 0)),
    )(af, af.T)


def _outer_kernel(a_ref, b_ref, o_ref):
    o_ref[...] = a_ref[...] * b_ref[...]        # (M,1)*(1,N) VPU broadcast


def pallas_outer(a_col, b_row):
    a_col = jnp.asarray(a_col, jnp.float32)
    b_row = jnp.asarray(b_row, jnp.float32)
    M = a_col.shape[0]
    N = b_row.shape[1]
    return pl.pallas_call(
        _outer_kernel,
        out_shape=jax.ShapeDtypeStruct((M, N), jnp.float32),
        grid=(1,),
        in_specs=[pl.BlockSpec((M, 1), lambda i: (0, 0)),
                  pl.BlockSpec((1, N), lambda i: (0, 0))],
        out_specs=pl.BlockSpec((M, N), lambda i: (0, 0)),
    )(a_col, b_row)


def _sumsq_kernel(x_ref, o_ref):
    x = x_ref[...]
    lane = jnp.sum(x * x, axis=1, keepdims=True)       # lane reduce -> (R, 1)
    o_ref[...] = jnp.sum(lane, axis=0, keepdims=True)   # sublane reduce -> (1, 1)


def pallas_norm(x):
    """Frobenius norm with a lane-dense (-1, 128) reduction layout."""
    flat = jnp.asarray(x, jnp.float32).reshape(-1)
    pad = (-flat.size) % (8 * 128)
    if pad:
        flat = jnp.pad(flat, (0, pad))
    x2 = flat.reshape(-1, 128)
    ss = pl.pallas_call(
        _sumsq_kernel,
        out_shape=jax.ShapeDtypeStruct((1, 1), jnp.float32),
        grid=(1,),
        in_specs=[pl.BlockSpec(x2.shape, lambda i: (0, 0))],
        out_specs=pl.BlockSpec((1, 1), lambda i: (0, 0)),
    )(x2)
    return jnp.sqrt(ss[0, 0])


# ----------------------------------------------------------------------------
# iPEPS building blocks (glue = reshapes/transposes; compute = Pallas kernels)
# ----------------------------------------------------------------------------
def symmetrize(A):
    """A(phy, up, left, down, right): left-right / up-down / diagonal symmetrize."""
    As = (A + jnp.transpose(A, (0, 1, 4, 3, 2))) / 2.0
    As = (As + jnp.transpose(As, (0, 3, 2, 1, 4))) / 2.0
    As = (As + jnp.transpose(As, (0, 4, 3, 2, 1))) / 2.0
    As = (As + jnp.transpose(As, (0, 2, 1, 4, 3))) / 2.0
    return As / pallas_norm(As)


def renormalize(C, E, T_flat, T_perm, dimT, chi):
    """One CTMRG renormalization step (tensorgrad semantics)."""
    dimE = E.shape[0]
    D_new = min(dimE * dimT, chi)
    E_flat = E.reshape(dimE, dimT * dimE)

    # --- Rho build: first two GEMMs fused in one kernel (VMEM intermediate) ---
    Rho = pallas_rho12(C, E_flat)                              # ((h,c),(g,a))
    Rho = Rho.reshape(dimT, dimE, dimT, dimE)                  # (h, c, g, a)
    Rho = jnp.transpose(Rho, (3, 1, 2, 0)).reshape(dimE * dimE, dimT * dimT)  # ((a,c),(g,h))
    Rho = pallas_matmul(Rho, T_flat)                            # ((a,c),(d,b))
    Rho = Rho.reshape(dimE, dimE, dimT, dimT)
    Rho = jnp.transpose(Rho, (0, 3, 1, 2)).reshape(dimE * dimT, dimE * dimT)  # ((a,b),(c,d))
    Rho = pallas_sym_normalize(Rho)                             # Rho+Rho^T, /||.|| fused

    # --- isometry ---
    # TODO(synk): SVD has no Pallas equivalent on TPU; use XLA's jnp.linalg.svd.
    U, S, _ = jnp.linalg.svd(Rho)
    truncation_error = jnp.sum(S[D_new:]) / jnp.sum(S)
    P = U[:, :D_new]

    # --- C renormalization: P^T Rho P + symmetrization, one kernel ---
    C_new = pallas_project_sym(Rho, P)

    # --- E renormalization ---
    P3_flat = P.reshape(dimE, dimT * D_new)
    Enew = pallas_matmul(E_flat, P3_flat, trans_a=True)         # ((e,f),(g,a))
    Enew = Enew.reshape(dimT, dimE, dimT, D_new)
    Em = jnp.transpose(Enew, (1, 3, 0, 2)).reshape(dimE * D_new, dimT * dimT)
    Enew = pallas_matmul(Em, T_perm)                            # ((f,a),(h,b))
    Enew = Enew.reshape(dimE, D_new, dimT, dimT)
    Em = jnp.transpose(Enew, (1, 3, 0, 2)).reshape(D_new * dimT, dimE * dimT)
    Enew = pallas_matmul(Em, P).reshape(D_new, dimT, D_new)     # (a,b,c)
    Enew = 0.5 * (Enew + jnp.transpose(Enew, (2, 1, 0)))

    s = jnp.abs(S)
    s = s / jnp.max(s)
    return C_new, Enew, s, truncation_error


def CTMRG(T, chi, max_iter):
    threshold = 1e-6  # float32 branch of the reference
    dimT = T.shape[0]
    C = jnp.sum(T, axis=(0, 1))
    E = jnp.transpose(jnp.sum(T, axis=1), (0, 2, 1))
    # Hoist the per-iteration T layouts out of the loop.
    T_flat = T.reshape(dimT * dimT, dimT * dimT)
    T_perm = jnp.transpose(T, (1, 0, 2, 3)).reshape(dimT * dimT, dimT * dimT)

    sold = jnp.zeros((chi,), dtype=T.dtype)
    trunc = jnp.zeros((), dtype=T.dtype)
    diff = jnp.asarray(10.0, dtype=T.dtype)
    n = 0

    # Phase 1 (trace-time Python loop): run while C/E/spectrum shapes still grow.
    # No host syncs: diff / truncation error stay as device scalars.
    while n < max_iter:
        shapes_in = (C.shape, E.shape, sold.shape)
        C, E, s, err = renormalize(C, E, T_flat, T_perm, dimT, chi)
        E = E / pallas_norm(E)
        trunc = trunc + err
        if s.shape == sold.shape:                       # static (trace-time) check
            diff = jnp.linalg.norm(s - sold)
        else:
            diff = jnp.asarray(10.0, dtype=T.dtype)
        sold = s
        n += 1
        if (C.shape, E.shape, s.shape) == shapes_in:
            break   # shapes are now stationary -> remaining iterations device-side

    # Phase 2: device-side lax.while_loop, convergence checked on device.
    if n < max_iter:
        def cond_fn(carry):
            _, _, _, _, diff_, n_ = carry
            return jnp.logical_and(n_ < max_iter, diff_ >= threshold)

        def body_fn(carry):
            C_, E_, sold_, trunc_, _, n_ = carry
            C2, E2, s2, err2 = renormalize(C_, E_, T_flat, T_perm, dimT, chi)
            E2 = E2 / pallas_norm(E2)
            diff2 = jnp.linalg.norm(s2 - sold_)
            return (C2, E2, s2, trunc_ + err2, diff2, n_ + 1)

        carry = (C, E, sold, trunc, diff, jnp.asarray(n, jnp.int32))
        C, E, _, trunc, _, _ = jax.lax.while_loop(cond_fn, body_fn, carry)
    return C, E


def build_Td(Asymm):
    """einsum('mefgh,nabcd->eafbgchdmn') as a Pallas outer product + reshape."""
    d, D = Asymm.shape[0], Asymm.shape[1]
    flat = Asymm.reshape(-1)
    outer = pallas_outer(flat.reshape(-1, 1), flat.reshape(1, -1))
    Td = outer.reshape(d, D, D, D, D, d, D, D, D, D)
    # TODO(synk): the 10-D permute has no clean in-kernel equivalent; left to
    # XLA (one-shot op outside the CTMRG loop).
    Td = jnp.transpose(Td, (1, 6, 2, 7, 3, 8, 4, 9, 0, 5))
    return Td.reshape(D * D, D * D, D * D, D * D, d, d)


def get_obs(Asymm, H, Sx, Sy, Sz, C, E):
    d, D = Asymm.shape[0], Asymm.shape[1]
    D2 = D * D
    chiE = E.shape[0]

    Td = build_Td(Asymm)
    CE = pallas_matmul(C, E.reshape(chiE, D2 * chiE)).reshape(chiE, D2, chiE)
    EL = pallas_matmul(E.reshape(chiE * D2, chiE),
                       CE.reshape(chiE, D2 * chiE)).reshape(chiE, D2, D2, chiE)
    ELm = jnp.transpose(EL, (0, 3, 1, 2)).reshape(chiE * chiE, D2 * D2)
    Tdm = jnp.transpose(Td, (1, 0, 2, 3, 4, 5)).reshape(D2 * D2, D2 * D2 * d * d)
    EL = pallas_matmul(ELm, Tdm).reshape(chiE, chiE, D2, D2, d, d)
    ELm = jnp.transpose(EL, (1, 3, 4, 5, 0, 2)).reshape(chiE * D2 * d * d, chiE * D2)
    EL = pallas_matmul(ELm, CE.reshape(chiE * D2, chiE)).reshape(chiE, D2, d, d, chiE)
    ELm = jnp.transpose(EL, (2, 3, 0, 1, 4)).reshape(d * d, chiE * D2 * chiE)
    Rho = pallas_self_gram(ELm).reshape(d, d, d, d)            # ELm @ ELm^T fused
    Rho = jnp.transpose(Rho, (0, 2, 1, 3)).reshape(d * d, d * d)
    Rho = 0.5 * (Rho + Rho.T)

    # d^2 x d^2 observables in plain JAX: a pallas_call per 4x4 trace would cost
    # more in launch overhead / masked stores than the arithmetic.
    Tnorm = jnp.trace(Rho)
    Energy = jnp.trace(Rho @ H) / Tnorm
    Mx = jnp.trace(Rho @ Sx) / Tnorm
    My = jnp.trace(Rho @ Sy) / Tnorm
    Mz = jnp.trace(Rho @ Sz) / Tnorm
    return Energy, Mx, My, Mz


# ----------------------------------------------------------------------------
# iPEPS module equivalent
# ----------------------------------------------------------------------------
class IPEPSPallas:
    def __init__(self, d, D, chi, Niter, key):
        self.d, self.D, self.chi, self.Niter = d, D, chi, Niter
        B = jax.random.uniform(key, (d, D, D, D, D), dtype=jnp.float32)
        self.A = B / pallas_norm(B)
        self._fwd = jax.jit(self._forward)

    def _forward(self, A, H, Mpx, Mpy, Mpz):
        d, D, chi, Niter = self.d, self.D, self.chi, self.Niter
        Asymm = symmetrize(A)
        Af = Asymm.reshape(d, -1)
        # Double-layer tensor: depth-d contraction done as VPU rank-1 updates.
        T = pallas_double_layer(Af).reshape(D, D, D, D, D, D, D, D)
        T = jnp.transpose(T, (0, 4, 1, 5, 2, 6, 3, 7)).reshape(D * D, D * D, D * D, D * D)
        T = T / pallas_norm(T)
        C, E = CTMRG(T, chi, Niter)
        return get_obs(Asymm, H, Mpx, Mpy, Mpz, C, E)

    def forward(self, H, Mpx, Mpy, Mpz, chi_arg):
        # (reference forward ignores the chi argument and uses self.chi)
        return self._fwd(self.A, H, Mpx, Mpy, Mpz)


if __name__ == "__main__":
    d, D, chi, Niter = 2, 2, 8, 6
    key = jax.random.PRNGKey(0)
    model = IPEPSPallas(d, D, chi, Niter, key)

    # Deterministic (d^2 x d^2) operators: Heisenberg-like H and kron(sigma, I).
    sx = 0.5 * jnp.array([[0.0, 1.0], [1.0, 0.0]], jnp.float32)
    isy = 0.5 * jnp.array([[0.0, 1.0], [-1.0, 0.0]], jnp.float32)  # real rep of i*Sy
    sz = 0.5 * jnp.array([[1.0, 0.0], [0.0, -1.0]], jnp.float32)
    id2 = jnp.eye(2, dtype=jnp.float32)

    H = (jnp.kron(sx, sx) - jnp.kron(isy, isy) + jnp.kron(sz, sz)).astype(jnp.float32)
    Mpx = jnp.kron(sx, id2).astype(jnp.float32)
    Mpy = jnp.kron(isy, id2).astype(jnp.float32)
    Mpz = jnp.kron(sz, id2).astype(jnp.float32)

    loss, Mx, My, Mz = model.forward(H, Mpx, Mpy, Mpz, chi)
    jax.block_until_ready((loss, Mx, My, Mz))
    print("KERNEL_OK")
</pallas_src>

<mosaic_0001>
module attributes {stable_mosaic.version = 11 : i64} {
  func.func @_sumsq_kernel(%arg0: i32, %arg1: memref<8x128xf32, #tpu.memory_space<vmem>>, %arg2: memref<1x1xf32, #tpu.memory_space<vmem>>) attributes {dimension_semantics = [#tpu.dimension_semantics<arbitrary>], iteration_bounds = array<i64: 1>, scalar_prefetch = 0 : i64, scratch_operands = 0 : i64, tpu.core_type = #tpu.core_type<tc>, window_params = [{pipeline_mode = #tpu.pipeline_mode<synchronous>, transform_indices = @transform_0, window_bounds = array<i64: 8, 128>}, {pipeline_mode = #tpu.pipeline_mode<synchronous>, transform_indices = @transform_1, window_bounds = array<i64: 1, 1>}]} {
    %c0 = arith.constant 0 : index
    %c0_0 = arith.constant 0 : index
    %0 = vector.load %arg1[%c0, %c0_0] : memref<8x128xf32, #tpu.memory_space<vmem>>, vector<8x128xf32>
    %1 = arith.mulf %0, %0 : vector<8x128xf32>
    %cst = arith.constant dense<0.000000e+00> : vector<8xf32>
    %2 = vector.multi_reduction <add>, %1, %cst [1] : vector<8x128xf32> to vector<8xf32>
    %3 = vector.shape_cast %2 : vector<8xf32> to vector<8x1xf32>
    %cst_1 = arith.constant dense<0.000000e+00> : vector<1xf32>
    %4 = vector.multi_reduction <add>, %3, %cst_1 [0] : vector<8x1xf32> to vector<1xf32>
    %5 = vector.shape_cast %4 : vector<1xf32> to vector<1x1xf32>
    %c0_2 = arith.constant 0 : index
    %c0_3 = arith.constant 0 : index
    %6 = vector.load %arg2[%c0_2, %c0_3] : memref<1x1xf32, #tpu.memory_space<vmem>>, vector<1x1xf32>
    tpu.vector_store %arg2[%c0_2, %c0_3], %5 {strides = array<i32>} : memref<1x1xf32, #tpu.memory_space<vmem>>, vector<1x1xf32>,
    return
  }
  func.func @transform_0(%arg0: i32) -> (i32, i32) {
    %c0_i32 = arith.constant 0 : i32
    %c0_i32_0 = arith.constant 0 : i32
    %c0_i32_1 = arith.constant 0 : i32
    return %c0_i32, %c0_i32_0 : i32, i32
  }
  func.func @transform_1(%arg0: i32) -> (i32, i32) {
    %c0_i32 = arith.constant 0 : i32
    %c0_i32_0 = arith.constant 0 : i32
    %c0_i32_1 = arith.constant 0 : i32
    return %c0_i32, %c0_i32_0 : i32, i32
  }
}

</mosaic_0001>

<llo_original>
// kernel: tpu_custom_call.1
$region0: #{tpu_custom_call.1}
  #allocation0 [shape = 'u32[]', space=smem, size = 0x4, offset = 0x4, fixed_abs, tag = 'smem constant byte address 0x4 - core index']
  #allocation1 [shape = 'u32[144,128]{1,0:T(1,128)}', space=vmem, size = 0x12000, scoped, tag = 'internal scratch']
  %s0 = inlined_call_operand.hbm [shape: f32[8,128], index: 0, kind: input, shape index: {}]
  %s1 = inlined_call_operand.hbm [shape: f32[1,1], index: 1, kind: output, shape index: {}]
  %s2 = sld [smem:[#allocation0]]
  $region18: #{tpu_custom_call.1} parent=0
    _
  %s4 = ssub.s32 1, %s2
  %s5 = scalar_select 0, %s4, %s2
  $region1: #{tpu_custom_call.1} parent=0
    #allocation2 [shape = 'u8[4096]{0}', space=vmem, size = 0x1000, scoped, tag = 'input window, operand 0, single buffered']
    #allocation3 [shape = 's32[1]{0}', space=sflag, size = 0x4, scoped, tag = 'scoped memory for tpu_custom_call.1']
    #allocation4 [shape = 's32[1]{0}', space=sflag, size = 0x4, scoped, tag = 'scoped memory for tpu_custom_call.1']
    #allocation5 [shape = 'u8[512]{0}', space=vmem, size = 0x400, scoped, tag = 'output window, operand 0, single buffered']
    %6 = vsyncpa [#allocation3], 0
    %7 = vsyncpa [#allocation4], 0
    // Predicated region
    $region2: #{tpu_custom_call.1} parent=1 // pred_check
      _
    $region3: #{tpu_custom_call.1} parent=1 // pred_check_branch
      %9 = sbr.rel (0) target = $region5
    $region4: #{tpu_custom_call.1} parent=1 // pred_region
      %s11 = ssub.s32 128, 128
      %12 = vsyncadd [#allocation3], %s11
      %s14 = sshll.u32 [#allocation2], 4
      %s15 = int_to_ptr.vmem [resolvable:$true] %s14
      %17 = dma.hbm_to_vmem [thread:$0]  %s0, 128, %s15, [#allocation3]
    $region5: #{tpu_custom_call.1} parent=1 // pred_fallthru
      _
    // Predicated region
    $region6: #{tpu_custom_call.1} parent=1 // pred_check
      _
    $region7: #{tpu_custom_call.1} parent=1 // pred_check_branch
      %19 = sbr.rel (0) target = $region9
    $region8: #{tpu_custom_call.1} parent=1 // pred_region
      %20 = dma.done [#allocation3], 128
    $region9: #{tpu_custom_call.1} parent=1 // pred_fallthru
      _
    %v21 = vld [vmem:[#allocation2] sm:$0xff]
    %v22 = vmul.f32 %v21, %v21
    %23 = vadd.xlane.f32.xlu0 %v22
    %v24 = vpop.xlane.xlu0 %23
    %v25 = vrot.slane %v24, 4
    %v26 = vadd.f32 %v24, %v25
    %v27 = vrot.slane %v26, 2
    %v28 = vadd.f32 %v26, %v27
    %v29 = vrot.slane %v28, 1
    %v30 = vadd.f32 %v28, %v29
    %vm31 = vcmask 0
    %32 = vst.msk [vmem:[#allocation5] sm:$0x1] %vm31, %v30
    // Predicated region
    $region10: #{tpu_custom_call.1} parent=1 // pred_check
      _
    $region11: #{tpu_custom_call.1} parent=1 // pred_check_branch
      %34 = sbr.rel (0) target = $region13
    $region12: #{tpu_custom_call.1} parent=1 // pred_region
      %s36 = ssub.s32 16, 16
      %37 = vsyncadd [#allocation4], %s36
      %s39 = sshll.u32 [#allocation5], 4
      %s40 = int_to_ptr.vmem [resolvable:$true] %s39
      %42 = dma.vmem_to_hbm [thread:$0]  %s40, 16, %s1, [#allocation4]
    $region13: #{tpu_custom_call.1} parent=1 // pred_fallthru
      _
    // Predicated region
    $region14: #{tpu_custom_call.1} parent=1 // pred_check
      _
    $region15: #{tpu_custom_call.1} parent=1 // pred_check_branch
      %44 = sbr.rel (0) target = $region17
    $region16: #{tpu_custom_call.1} parent=1 // pred_region
      %45 = dma.done [#allocation4], 16
    $region17: #{tpu_custom_call.1} parent=1 // pred_fallthru
      _
    %46 = vsyncpa [#allocation3], 1
    %47 = vsyncpa [#allocation4], 1

</llo_original>
